<compile_context>
chip_gen: v6e
topology: v6e:2x2x1
jax: 0.10.0
libtpu: 0.0.40
codegen_flags: <defaults>
</compile_context>

<pallas_src>
import functools

import jax
import jax.numpy as jnp
from jax.experimental import pallas as pl
from jax.experimental.pallas import tpu as pltpu


def _smoothing_loss_kernel(pred_ref, tgt_ref, out_ref, *, smoothing, n_valid):
    """One row tile: fused log-softmax + two-neighbour smoothed CE, reduced to
    a single per-tile partial sum, broadcast into a lane-dense (8, 128) block."""
    x = pred_ref[...].astype(jnp.float32)                  # (TM, C)
    tm, num_classes = x.shape
    tgt = tgt_ref[...]                                     # (TM, 1) int32

    ids = jax.lax.broadcasted_iota(jnp.int32, (tm, num_classes), 1)

    up = tgt + 1
    up = jnp.where(up >= num_classes, num_classes - 2, up)
    down = tgt - 1
    down = jnp.where(down < 0, 1, down)

    half = jnp.float32(smoothing / 2.0)
    confidence = jnp.float32(1.0 - smoothing)

    # up != tgt and down != tgt always, so a plain sum of masked terms
    # reproduces the scatter_add_ + scatter_ semantics exactly (including
    # up == down at the boundaries, where both halves land on one class).
    w = (confidence * (ids == tgt).astype(jnp.float32)
         + half * (ids == up).astype(jnp.float32)
         + half * (ids == down).astype(jnp.float32))       # (TM, C)

    # Fused loss:  sum(-w * log_softmax(x)) = lse * sum(w) - sum(w * x),
    # and sum(w) == confidence + 2*half == 1, so row_loss = lse - sum(w*x).
    m = jnp.max(x, axis=-1, keepdims=True)                 # (TM, 1)
    lse = m + jnp.log(jnp.sum(jnp.exp(x - m), axis=-1, keepdims=True))
    wx = jnp.sum(w * x, axis=-1, keepdims=True)            # (TM, 1)
    row_loss = lse - wx                                    # (TM, 1)

    if n_valid is not None:
        # Last block is partial: rows >= n_valid hold undefined VMEM contents
        # (possibly Inf/NaN).  Select them away before the cross-row sum;
        # a select (not a multiply) discards NaN safely.
        i = pl.program_id(0)
        row_ids = i * tm + jax.lax.broadcasted_iota(jnp.int32, (tm, 1), 0)
        row_loss = jnp.where(row_ids < n_valid, row_loss, 0.0)

    tile_sum = jnp.sum(row_loss, axis=0, keepdims=True)    # (1, 1)
    out_ref[...] = jnp.broadcast_to(tile_sum, out_ref.shape)


def two_neighbour_smoothing_loss(pred, target, *, smoothing=0.1, row_tile=None):
    """pred: (N, C) float logits; target: (N,) integer class indices."""
    n, c = pred.shape
    itemsize = pred.dtype.itemsize
    # Minimum sublane multiple for the HBM-side pred block:
    # f32 -> 8 rows, bf16 -> 16, int8/fp8 -> 32 (int32 targets need 8, which
    # every value below also satisfies).
    sublane = max(8, 32 // itemsize)

    if row_tile is None:
        # Byte-based, dtype-aware tile sizing.  Estimated peak VMEM per step:
        #   2 * elems * itemsize   (double-buffered HBM-side pred tile)
        # + ~3 * elems * 4         (live f32 (TM, C) temporaries in-kernel)
        # Keep the estimate at ~24 MiB; vmem_limit_bytes below is 40 MiB,
        # safe on v5e/v6e (128 MiB) and v7x (64 MiB physical).
        elems = (24 * 1024 * 1024) // (2 * itemsize + 12)
        row_tile = elems // max(c, 1)
    # Keep >= 2 grid steps when possible so the "parallel" axis can shard
    # across both TensorCores on a megacore chip (v7x); no-op on v5e/v6e.
    half_rows = -(-((n + 1) // 2) // sublane) * sublane
    row_tile = min(row_tile, half_rows)
    row_tile = max(sublane, (row_tile // sublane) * sublane)

    grid = pl.cdiv(n, row_tile)
    tgt2d = target.astype(jnp.int32).reshape(n, 1)

    kernel = functools.partial(
        _smoothing_loss_kernel,
        smoothing=smoothing,
        n_valid=None if n % row_tile == 0 else n)

    partials = pl.pallas_call(
        kernel,
        out_shape=jax.ShapeDtypeStruct((grid * 8, 128), jnp.float32),
        grid_spec=pltpu.PrefetchScalarGridSpec(
            num_scalar_prefetch=0,
            grid=(grid,),
            in_specs=[
                pl.BlockSpec((row_tile, c), lambda i: (i, 0)),
                pl.BlockSpec((row_tile, 1), lambda i: (i, 0)),
            ],
            # One disjoint, fully lane-dense (8, 128) block per grid step,
            # holding that step's partial sum broadcast across all lanes.
            out_specs=pl.BlockSpec((8, 128), lambda i: (i, 0)),
        ),
        compiler_params=pltpu.CompilerParams(
            dimension_semantics=("parallel",),
            vmem_limit_bytes=40 * 1024 * 1024,
        ),
    )(pred, tgt2d)

    # One scalar per grid step (every element of a step's block is identical),
    # then a single final sum and divide by N (matches the reference mean).
    per_tile = partials[0::8, 0]
    return jnp.sum(per_tile) / jnp.float32(n)


def _reference(pred, target, smoothing=0.1):
    # Pure-JAX reference mirroring the PyTorch module.
    n, c = pred.shape
    logp = jax.nn.log_softmax(pred.astype(jnp.float32), axis=-1)
    tgt = target.astype(jnp.int32).reshape(n, 1)
    ids = jnp.arange(c, dtype=jnp.int32)[None, :]
    up = jnp.where(tgt + 1 >= c, c - 2, tgt + 1)
    down = jnp.where(tgt - 1 < 0, 1, tgt - 1)
    half = smoothing / 2.0
    td = half * (ids == up).astype(jnp.float32) \
       + half * (ids == down).astype(jnp.float32)
    td = jnp.where(ids == tgt, 1.0 - smoothing, td)
    return jnp.mean(jnp.sum(-td * logp, axis=-1))


if __name__ == "__main__":
    key = jax.random.PRNGKey(0)
    k1, k2, k3, k4 = jax.random.split(key, 4)

    # Case 1: tile-aligned f32 (batch=16, classes=32), with boundary targets
    # to exercise the up/down clamping.
    pred = jax.random.normal(k1, (16, 32), dtype=jnp.float32)
    target = jax.random.randint(k2, (16,), 0, 32, dtype=jnp.int32)
    target = target.at[0].set(0).at[1].set(31)
    loss = jax.block_until_ready(two_neighbour_smoothing_loss(pred, target))
    ref = _reference(pred, target)
    assert jnp.allclose(loss, ref, atol=1e-5, rtol=1e-5), (loss, ref)

    # Case 2: non-tile-aligned N (exercises the partial last block + mask).
    pred2 = jax.random.normal(k3, (50, 32), dtype=jnp.float32)
    target2 = jax.random.randint(k4, (50,), 0, 32, dtype=jnp.int32)
    loss2 = jax.block_until_ready(two_neighbour_smoothing_loss(pred2, target2))
    ref2 = _reference(pred2, target2)
    assert jnp.allclose(loss2, ref2, atol=1e-5, rtol=1e-5), (loss2, ref2)

    # Case 3: bf16 logits (exercises 16-row sublane tiling + dtype-aware sizing).
    pred3 = jax.random.normal(k1, (40, 24), dtype=jnp.float32).astype(jnp.bfloat16)
    target3 = jax.random.randint(k2, (40,), 0, 24, dtype=jnp.int32)
    loss3 = jax.block_until_ready(two_neighbour_smoothing_loss(pred3, target3))
    ref3 = _reference(pred3, target3)
    assert jnp.allclose(loss3, ref3, atol=1e-4, rtol=1e-4), (loss3, ref3)

    print("KERNEL_OK")
</pallas_src>

<mosaic_0001>
module attributes {stable_mosaic.version = 11 : i64} {
  func.func @_smoothing_loss_kernel(%arg0: i32, %arg1: memref<8x32xf32, #tpu.memory_space<vmem>>, %arg2: memref<8x1xi32, #tpu.memory_space<vmem>>, %arg3: memref<8x128xf32, #tpu.memory_space<vmem>>) attributes {dimension_semantics = [#tpu.dimension_semantics<parallel>], iteration_bounds = array<i64: 2>, scalar_prefetch = 0 : i64, scratch_operands = 0 : i64, tpu.core_type = #tpu.core_type<tc>, window_params = [{transform_indices = @transform_0, window_bounds = array<i64: 8, 32>}, {transform_indices = @transform_1, window_bounds = array<i64: 8, 1>}, {transform_indices = @transform_2, window_bounds = array<i64: 8, 128>}]} {
    %c0 = arith.constant 0 : index
    %c0_0 = arith.constant 0 : index
    %0 = vector.load %arg1[%c0, %c0_0] : memref<8x32xf32, #tpu.memory_space<vmem>>, vector<8x32xf32>
    %c0_1 = arith.constant 0 : index
    %c0_2 = arith.constant 0 : index
    %1 = vector.load %arg2[%c0_1, %c0_2] : memref<8x1xi32, #tpu.memory_space<vmem>>, vector<8x1xi32>
    %2 = tpu.iota {dimensions = array<i32: 1>} : vector<8x32xi32>
    %c1_i32 = arith.constant 1 : i32
    %3 = vector.broadcast %c1_i32 : i32 to vector<8x1xi32>
    %4 = arith.addi %1, %3 : vector<8x1xi32>
    %c32_i32 = arith.constant 32 : i32
    %5 = vector.broadcast %c32_i32 : i32 to vector<8x1xi32>
    %6 = arith.cmpi sge, %4, %5 : vector<8x1xi32>
    %c30_i32 = arith.constant 30 : i32
    %7 = vector.broadcast %c30_i32 : i32 to vector<8x1xi32>
    %8 = arith.select %6, %7, %4 : vector<8x1xi1>, vector<8x1xi32>
    %c1_i32_3 = arith.constant 1 : i32
    %9 = vector.broadcast %c1_i32_3 : i32 to vector<8x1xi32>
    %10 = arith.subi %1, %9 : vector<8x1xi32>
    %c0_i32 = arith.constant 0 : i32
    %11 = vector.broadcast %c0_i32 : i32 to vector<8x1xi32>
    %12 = arith.cmpi slt, %10, %11 : vector<8x1xi32>
    %c1_i32_4 = arith.constant 1 : i32
    %13 = vector.broadcast %c1_i32_4 : i32 to vector<8x1xi32>
    %14 = arith.select %12, %13, %10 : vector<8x1xi1>, vector<8x1xi32>
    %15 = vector.broadcast %1 : vector<8x1xi32> to vector<8x32xi32>
    %16 = arith.cmpi eq, %2, %15 : vector<8x32xi32>
    %17 = arith.extui %16 : vector<8x32xi1> to vector<8x32xi32>
    %18 = arith.sitofp %17 : vector<8x32xi32> to vector<8x32xf32>
    %cst = arith.constant 0.899999976 : f32
    %19 = vector.broadcast %cst : f32 to vector<8x32xf32>
    %20 = arith.mulf %19, %18 : vector<8x32xf32>
    %21 = vector.broadcast %8 : vector<8x1xi32> to vector<8x32xi32>
    %22 = arith.cmpi eq, %2, %21 : vector<8x32xi32>
    %23 = arith.extui %22 : vector<8x32xi1> to vector<8x32xi32>
    %24 = arith.sitofp %23 : vector<8x32xi32> to vector<8x32xf32>
    %cst_5 = arith.constant 5.000000e-02 : f32
    %25 = vector.broadcast %cst_5 : f32 to vector<8x32xf32>
    %26 = arith.mulf %25, %24 : vector<8x32xf32>
    %27 = arith.addf %20, %26 : vector<8x32xf32>
    %28 = vector.broadcast %14 : vector<8x1xi32> to vector<8x32xi32>
    %29 = arith.cmpi eq, %2, %28 : vector<8x32xi32>
    %30 = arith.extui %29 : vector<8x32xi1> to vector<8x32xi32>
    %31 = arith.sitofp %30 : vector<8x32xi32> to vector<8x32xf32>
    %cst_6 = arith.constant 5.000000e-02 : f32
    %32 = vector.broadcast %cst_6 : f32 to vector<8x32xf32>
    %33 = arith.mulf %32, %31 : vector<8x32xf32>
    %34 = arith.addf %27, %33 : vector<8x32xf32>
    %cst_7 = arith.constant dense<0xFF800000> : vector<8xf32>
    %35 = vector.multi_reduction <maximumf>, %0, %cst_7 [1] : vector<8x32xf32> to vector<8xf32>
    %36 = vector.shape_cast %35 : vector<8xf32> to vector<8x1xf32>
    %37 = vector.broadcast %36 : vector<8x1xf32> to vector<8x32xf32>
    %38 = arith.subf %0, %37 : vector<8x32xf32>
    %39 = math.exp %38 : vector<8x32xf32>
    %cst_8 = arith.constant dense<0.000000e+00> : vector<8xf32>
    %40 = vector.multi_reduction <add>, %39, %cst_8 [1] : vector<8x32xf32> to vector<8xf32>
    %41 = vector.shape_cast %40 : vector<8xf32> to vector<8x1xf32>
    %42 = math.log %41 : vector<8x1xf32>
    %43 = arith.addf %36, %42 : vector<8x1xf32>
    %44 = arith.mulf %34, %0 : vector<8x32xf32>
    %cst_9 = arith.constant dense<0.000000e+00> : vector<8xf32>
    %45 = vector.multi_reduction <add>, %44, %cst_9 [1] : vector<8x32xf32> to vector<8xf32>
    %46 = vector.shape_cast %45 : vector<8xf32> to vector<8x1xf32>
    %47 = arith.subf %43, %46 : vector<8x1xf32>
    %cst_10 = arith.constant dense<0.000000e+00> : vector<1xf32>
    %48 = vector.multi_reduction <add>, %47, %cst_10 [0] : vector<8x1xf32> to vector<1xf32>
    %49 = vector.shape_cast %48 : vector<1xf32> to vector<1x1xf32>
    %50 = vector.shape_cast %49 : vector<1x1xf32> to vector<1x1xf32>
    %51 = vector.broadcast %50 : vector<1x1xf32> to vector<8x128xf32>
    %c0_11 = arith.constant 0 : index
    %c0_12 = arith.constant 0 : index
    %52 = vector.load %arg3[%c0_11, %c0_12] : memref<8x128xf32, #tpu.memory_space<vmem>>, vector<8x128xf32>
    tpu.vector_store %arg3[%c0_11, %c0_12], %51 {strides = array<i32>} : memref<8x128xf32, #tpu.memory_space<vmem>>, vector<8x128xf32>,
    return
  }
  func.func @transform_0(%arg0: i32) -> (i32, i32) {
    %c0_i32 = arith.constant 0 : i32
    %c0_i32_0 = arith.constant 0 : i32
    return %arg0, %c0_i32 : i32, i32
  }
  func.func @transform_1(%arg0: i32) -> (i32, i32) {
    %c0_i32 = arith.constant 0 : i32
    %c0_i32_0 = arith.constant 0 : i32
    return %arg0, %c0_i32 : i32, i32
  }
  func.func @transform_2(%arg0: i32) -> (i32, i32) {
    %c0_i32 = arith.constant 0 : i32
    %c0_i32_0 = arith.constant 0 : i32
    return %arg0, %c0_i32 : i32, i32
  }
}

</mosaic_0001>

<llo_original>
// kernel: tpu_custom_call.1
$region0: #{tpu_custom_call.1}
  #allocation0 [shape = 'u32[]', space=smem, size = 0x4, offset = 0x4, fixed_abs, tag = 'smem constant byte address 0x4 - core index']
  #allocation1 [shape = 'u32[144,128]{1,0:T(1,128)}', space=vmem, size = 0x12000, scoped, tag = 'internal scratch']
  %s0 = inlined_call_operand.vmem [shape: f32[16,32], index: 0, kind: input, shape index: {}]
  %s1 = inlined_call_operand.vmem [shape: s32[16,1], index: 1, kind: input, shape index: {}]
  %s2 = inlined_call_operand.hbm [shape: f32[16,128], index: 2, kind: output, shape index: {}]
  %s3 = sld [smem:[#allocation0]]
  $region41: #{tpu_custom_call.1} parent=0
    _
  %s5 = ssub.s32 1, %s3
  %s6 = scalar_select 0, %s5, %s3
  $region1: #{tpu_custom_call.1} parent=0
    #allocation2 [shape = 'u8[8192]{0}', space=vmem, size = 0x2000, scoped, tag = 'output window, operand 0']
    #allocation3 [shape = 's32[2]{0}', space=sflag, size = 0x8, scoped, tag = 'scoped memory for tpu_custom_call.1']
    %7 = vsyncpa [#allocation3], 0
    %s8 = scalar_lea.sflag [#allocation3], 1
    %9 = vsyncpa %s8, 0
    loop: start=0, step=1, limit=4
    $region2: #{tpu_custom_call.1} parent=1 // loop_pre_header
      _
    $region3: #{tpu_custom_call.1} parent=1 // loop_header
      %s11 = sphi 0, %s15
      %p12 = scmp.ge.s32.totalorder %s11, 4
      %s21 = sphi 0, %s23
      %s24 = sphi 0, %s21
      %s25 = sphi 0, %s24
      %s41 = sphi 0, %s25
      %s47 = sphi 0, %s49
      %s50 = sphi 0, %s47
      %s51 = sphi 0, %s50
      %s67 = sphi 0, %s51
      %s73 = sphi 0, %s75
      %s76 = sphi 0, %s73
      %s77 = sphi 0, %s76
      %s93 = sphi 0, %s77
    $region4: #{tpu_custom_call.1} parent=1 // loop_header_branch
      %14 = sbr.rel (%p12) target = $region8
    $region5: #{tpu_custom_call.1} parent=1 // loop_body
      %s16 = ssub.s32 %s11, 1
      %s17 = ssub.s32 %s11, 2
      %s18 = sadd.s32 %s11, 1
      %s19 = ssub.s32 %s11, %s18
      %p20 = scmp.eq.s32.totalorder %s19, 0
      %s22 = sadd.s32 %s21, 1
      %s23 = scalar_select %p20, %s21, %s22
      %p26 = pneg %p20
      %p27 = scmp.eq.s32.totalorder %s11, 1
      %p28 = por %p26, %p27
      %p29 = scmp.ne.s32.totalorder %s21, %s24
      %p30 = scmp.eq.s32.totalorder %s11, 0
      %p31 = por %p29, %p30
      %p32 = scmp.ne.s32.totalorder %s21, %s24
      %p33 = scmp.eq.s32.totalorder %s16, 1
      %p34 = por %p32, %p33
      %p35 = scmp.ne.s32.totalorder %s24, %s25
      %p36 = scmp.eq.s32.totalorder %s16, 0
      %p37 = por %p35, %p36
      %p38 = scmp.ne.s32.totalorder %s24, %s25
      %p39 = scmp.eq.s32.totalorder %s17, 1
      %p40 = por %p38, %p39
      %p42 = scmp.ne.s32.totalorder %s25, %s41
      %p43 = scmp.eq.s32.totalorder %s17, 0
      %p44 = por %p42, %p43
      %s45 = ssub.s32 %s11, %s18
      %p46 = scmp.eq.s32.totalorder %s45, 0
      %s48 = sadd.s32 %s47, 1
      %s49 = scalar_select %p46, %s47, %s48
      %p52 = pneg %p46
      %p53 = scmp.eq.s32.totalorder %s11, 1
      %p54 = por %p52, %p53
      %p55 = scmp.ne.s32.totalorder %s47, %s50
      %p56 = scmp.eq.s32.totalorder %s11, 0
      %p57 = por %p55, %p56
      %p58 = scmp.ne.s32.totalorder %s47, %s50
      %p59 = scmp.eq.s32.totalorder %s16, 1
      %p60 = por %p58, %p59
      %p61 = scmp.ne.s32.totalorder %s50, %s51
      %p62 = scmp.eq.s32.totalorder %s16, 0
      %p63 = por %p61, %p62
      %p64 = scmp.ne.s32.totalorder %s50, %s51
      %p65 = scmp.eq.s32.totalorder %s17, 1
      %p66 = por %p64, %p65
      %p68 = scmp.ne.s32.totalorder %s51, %s67
      %p69 = scmp.eq.s32.totalorder %s17, 0
      %p70 = por %p68, %p69
      %s71 = ssub.s32 %s11, %s18
      %p72 = scmp.eq.s32.totalorder %s71, 0
      %s74 = sadd.s32 %s73, 1
      %s75 = scalar_select %p72, %s73, %s74
      %p78 = pneg %p72
      %p79 = scmp.eq.s32.totalorder %s11, 1
      %p80 = por %p78, %p79
      %p81 = scmp.ne.s32.totalorder %s73, %s76
      %p82 = scmp.eq.s32.totalorder %s11, 0
      %p83 = por %p81, %p82
      %p84 = scmp.ne.s32.totalorder %s73, %s76
      %p85 = scmp.eq.s32.totalorder %s16, 1
      %p86 = por %p84, %p85
      %p87 = scmp.ne.s32.totalorder %s76, %s77
      %p88 = scmp.eq.s32.totalorder %s16, 0
      %p89 = por %p87, %p88
      %p90 = scmp.ne.s32.totalorder %s76, %s77
      %p91 = scmp.eq.s32.totalorder %s17, 1
      %p92 = por %p90, %p91
      %p94 = scmp.ne.s32.totalorder %s77, %s93
      %p95 = scmp.eq.s32.totalorder %s17, 0
      %p96 = por %p94, %p95
      %p97 = scmp.le.s32.totalorder 1, %s11
      %p98 = scmp.lt.s32.totalorder %s11, 3
      %p99 = pnand %p97, %p98
      %p100 = pneg %p99
      // Predicated region
      $region9: #{tpu_custom_call.1} parent=5 // pred_check
        _
      $region10: #{tpu_custom_call.1} parent=5 // pred_check_branch
        %102 = sbr.rel (%p99) target = $region12
      $region11: #{tpu_custom_call.1} parent=5 // pred_region
        %s103 = ssub.s32 %s11, 1
      $region12: #{tpu_custom_call.1} parent=5 // pred_fallthru
        _
      %p104 = scmp.lt.s32.totalorder %s11, 2
      // Predicated region
      $region13: #{tpu_custom_call.1} parent=5 // pred_check
        %p105 = pneg %p104
      $region14: #{tpu_custom_call.1} parent=5 // pred_check_branch
        %107 = sbr.rel (%p105) target = $region16
      $region15: #{tpu_custom_call.1} parent=5 // pred_region
        // Predicated region
        $region17: #{tpu_custom_call.1} parent=15 // pred_check
          %p108 = pneg %p31
        $region18: #{tpu_custom_call.1} parent=15 // pred_check_branch
          %110 = sbr.rel (%p108) target = $region20
        $region19: #{tpu_custom_call.1} parent=15 // pred_region
          %p111 = scmp.lt.s32.totalorder %s11, 1
          %s112 = scalar_select %p111, %s11, 1
          %s113 = smul.addr %s112, 8
          %s114 = scalar_lea.vmem %s0, %s113
        $region20: #{tpu_custom_call.1} parent=15 // pred_fallthru
          _
        // Predicated region
        $region21: #{tpu_custom_call.1} parent=15 // pred_check
          %p115 = pneg %p57
        $region22: #{tpu_custom_call.1} parent=15 // pred_check_branch
          %117 = sbr.rel (%p115) target = $region24
        $region23: #{tpu_custom_call.1} parent=15 // pred_region
          %p118 = scmp.lt.s32.totalorder %s11, 1
          %s119 = scalar_select %p118, %s11, 1
          %s120 = smul.addr %s119, 8
          %s121 = scalar_lea.vmem %s1, %s120
        $region24: #{tpu_custom_call.1} parent=15 // pred_fallthru
          _
      $region16: #{tpu_custom_call.1} parent=5 // pred_fallthru
        _
      %p122 = scmp.le.s32.totalorder 1, %s11
      %p123 = scmp.lt.s32.totalorder %s11, 3
      %p124 = pnand %p122, %p123
      %p125 = pneg %p124
      // Predicated region
      $region25: #{tpu_custom_call.1} parent=5 // pred_check
        _
      $region26: #{tpu_custom_call.1} parent=5 // pred_check_branch
        %127 = sbr.rel (%p124) target = $region28
      $region27: #{tpu_custom_call.1} parent=5 // pred_region
        %s128 = ssub.s32 %s11, 1
        %p129 = scmp.lt.s32.totalorder %s16, 1
        %s130 = scalar_select %p129, %s16, 1
        %s131 = smul.addr %s130, 8
        %s132 = scalar_lea.vmem %s0, %s131
        %p133 = pneg %p37
        %p134 = pneg %p34
        %p135 = scmp.lt.s32.totalorder %s16, 1
        %s136 = scalar_select %p135, %s16, 1
        %s137 = smul.addr %s136, 8
        %s138 = scalar_lea.vmem %s1, %s137
        %p139 = pneg %p63
        %p140 = pneg %p60
        %p141 = pneg %p89
        %p142 = pneg %p86
        %s143 = sand.u32 %s76, 1
        %s144 = scalar_lea.sflag [#allocation3], %s143
        %s145 = sand.u32 %s76, 1
        %s146 = smul.addr %s145, 8
        %s147 = scalar_lea.vmem [#allocation2], %s146
        %p148 = scmp.lt.s32.totalorder %s16, 1
        %s149 = scalar_select %p148, %s16, 1
        %s150 = smul.addr %s149, 8
        %s151 = scalar_lea.vmem %s0, %s150
        %p152 = scmp.lt.s32.totalorder %s16, 1
        %s153 = scalar_select %p152, %s16, 1
        %s154 = smul.addr %s153, 8
        %s155 = scalar_lea.vmem %s1, %s154
        %v156 = vld [vmem:[%s151] sm:$0xff]
        %v157 = vld [vmem:[%s155] sm:$0xff]
        %v158 = vlaneseq
        %v159 = vand.u32 %v158, 127
        %v160 = vadd.s32 %v157, 1
        %vm161 = vcmp.ge.s32.totalorder %v160, 32
        %v162 = vsel %vm161, 30, %v160
        %v163 = vsub.s32 %v157, 1
        %vm164 = vcmp.lt.s32.totalorder %v163, 0
        %v165 = vsel %vm164, 1, %v163
        %166 = vset.pattern.permute.xlu0 0
        %167 = vperm.xlu0 %166, %v157
        %v168 = vpop.permute.xlu0 %167
        %vm169 = vcmp.eq.s32.totalorder %v159, %v168
        %v170 = vsel %vm169, 1, 0
        %v171 = vcvt.s32.f32 %v170
        %v172 = vmul.f32 %v171, 0.9
        %173 = vset.pattern.permute.xlu0 0
        %174 = vperm.xlu0 %173, %v162
        %v175 = vpop.permute.xlu0 %174
        %vm176 = vcmp.eq.s32.totalorder %v159, %v175
        %v177 = vsel %vm176, 1, 0
        %v178 = vcvt.s32.f32 %v177
        %v179 = vmul.f32 %v178, 0.05
        %v180 = vadd.f32 %v172, %v179
        %181 = vset.pattern.permute.xlu0 0
        %182 = vperm.xlu0 %181, %v165
        %v183 = vpop.permute.xlu0 %182
        %vm184 = vcmp.eq.s32.totalorder %v159, %v183
        %v185 = vsel %vm184, 1, 0
        %v186 = vcvt.s32.f32 %v185
        %v187 = vmul.f32 %v186, 0.05
        %v188 = vadd.f32 %v180, %v187
        %vm189 = vcmask 261120
        %v190 = vsel %vm189, %v156, -inf
        %191 = vmax.xlane.f32.xlu0 %v190
        %v192 = vpop.xlane.xlu0 %191
        %v193 = vsub.f32 %v156, %v192
        %v194 = vmul.f32 %v193, 1.442695
        %v195 = vpow.pop %v194
        %v196 = vsel %vm189, %v195, 0.0
        %197 = vadd.xlane.f32.xlu0 %v196
        %v198 = vpop.xlane.xlu0 %197
        %v199 = vlog2.pop %v198
        %v200 = vmul.f32 %v199, 0.6931472
        %v201 = vadd.f32 %v192, %v200
        %v202 = vmul.f32 %v188, %v156
        %v203 = vsel %vm189, %v202, 0.0
        %204 = vadd.xlane.f32.xlu0 %v203
        %v205 = vpop.xlane.xlu0 %204
        %v206 = vsub.f32 %v201, %v205
        %v207 = vrot.slane %v206, 4
        %v208 = vadd.f32 %v206, %v207
        %v209 = vrot.slane %v208, 2
        %v210 = vadd.f32 %v208, %v209
        %v211 = vrot.slane %v210, 1
        %v212 = vadd.f32 %v210, %v211
        %213 = vst [vmem:[%s147] sm:$0xff] %v212
        %s214 = sand.u32 %s76, 1
        %s215 = scalar_lea.sflag [#allocation3], %s214
        %s216 = sand.u32 %s76, 1
        %s217 = smul.addr %s216, 8
        %s218 = scalar_lea.vmem [#allocation2], %s217
        // Predicated region
        $region29: #{tpu_custom_call.1} parent=27 // pred_check
          %p219 = pneg %p86
        $region30: #{tpu_custom_call.1} parent=27 // pred_check_branch
          %221 = sbr.rel (%p219) target = $region32
        $region31: #{tpu_custom_call.1} parent=27 // pred_region
          %s223 = ssub.s32 128, 128
          %224 = vsyncadd %s215, %s223
          %s225 = smul.addr %s16, 128
          %s226 = scalar_lea.hbm %s2, %s225
          %s228 = sshll.u32 %s218, 4
          %s229 = int_to_ptr.vmem [resolvable:$true] %s228
          %231 = dma.vmem_to_hbm [thread:$0]  %s229, 128, %s226, %s215
        $region32: #{tpu_custom_call.1} parent=27 // pred_fallthru
          _
      $region28: #{tpu_custom_call.1} parent=5 // pred_fallthru
        _
      %p232 = scmp.le.s32.totalorder 2, %s11
      // Predicated region
      $region33: #{tpu_custom_call.1} parent=5 // pred_check
        %p233 = pneg %p232
      $region34: #{tpu_custom_call.1} parent=5 // pred_check_branch
        %235 = sbr.rel (%p233) target = $region36
      $region35: #{tpu_custom_call.1} parent=5 // pred_region
        %s236 = ssub.s32 %s11, 2
        // Predicated region
        $region37: #{tpu_custom_call.1} parent=35 // pred_check
          %p237 = pneg %p92
        $region38: #{tpu_custom_call.1} parent=35 // pred_check_branch
          %239 = sbr.rel (%p237) target = $region40
        $region39: #{tpu_custom_call.1} parent=35 // pred_region
          %s240 = sand.u32 %s77, 1
          %s241 = scalar_lea.sflag [#allocation3], %s240
          %s242 = sand.u32 %s77, 1
          %s243 = smul.addr %s242, 8
          %s244 = scalar_lea.vmem [#allocation2], %s243
          %245 = dma.done %s241, 128
        $region40: #{tpu_custom_call.1} parent=35 // pred_fallthru
          _
      $region36: #{tpu_custom_call.1} parent=5 // pred_fallthru
        _
    $region6: #{tpu_custom_call.1} parent=1 // loop_footer
      %s15 = sadd.s32 1, %s11
    $region7: #{tpu_custom_call.1} parent=1 // loop_footer_branch
      %10 = sbr.rel target = $region3
    $region8: #{tpu_custom_call.1} parent=1 // loop_exit
      _
    %246 = vsyncpa [#allocation3], 1
    %s247 = scalar_lea.sflag [#allocation3], 1
    %248 = vsyncpa %s247, 1

</llo_original>
